<compile_context>
chip_gen: v5e
topology: v5e:2x2
jax: 0.10.0
libtpu: 0.0.40
codegen_flags: <defaults>
</compile_context>

<pallas_src>
import functools

import jax
import jax.numpy as jnp
from jax import lax
from jax.experimental import pallas as pl
from jax.experimental.pallas import tpu as pltpu


# ~2 MiB per stream per block: 3 streams x 2 buffers stays ~12-16 MiB, safe on
# every generation (v5e 16 MiB scoped default, v7x 64 MiB physical per TC).
_TARGET_BLOCK_BYTES = 2 * 1024 * 1024
_VMEM_LIMIT_BYTES = 48 * 1024 * 1024


def _sublane_for_itemsize(itemsize):
    return {4: 8, 2: 16, 1: 32}.get(int(itemsize), 8)


def _choose_tiles(B, R, lanes, itemsize):
    """Pick (batch_tile, row_tile) so one x block is ~_TARGET_BLOCK_BYTES.

    R = rows per batch element, lanes = last-dim width.  Row tile is kept a
    multiple of the dtype's sublane packing unless it is the full dimension,
    and we guarantee >= 2 grid steps whenever the shape allows it so the
    pipeline double-buffers and both v7x TensorCores get work.
    """
    itemsize = int(itemsize)
    sublane = _sublane_for_itemsize(itemsize)
    target_rows = max(sublane, _TARGET_BLOCK_BYTES // max(1, lanes * itemsize))
    if R > target_rows:
        tR = max(sublane, (target_rows // sublane) * sublane)
        tB = 1
    else:
        tR = R
        tB = max(1, min(B, target_rows // max(1, R)))
    # Guarantee >= 2 grid steps (pipelining + v7x 2-TC sharding).
    if tB >= B and tR >= R:
        if B >= 2:
            tB = (B + 1) // 2
        elif R >= 2 * sublane:
            half = (R + 1) // 2
            tR = max(sublane, ((half + sublane - 1) // sublane) * sublane)
    return tB, tR


def _tempoenc_packed_kernel(x_ref, enc_ref, gb_ref, seg_ref, o_ref, *, eps, d):
    """Lane-dense path: last dim is 128 = pack * d; each 128-lane row holds
    `pack` independent LayerNorm rows of width d.  Segmented sums are done as
    matmuls against a constant 128x128 block-diagonal ones matrix (MXU is
    otherwise idle on this memory-bound kernel)."""
    lanes = x_ref.shape[-1]                               # 128
    x = x_ref[...].astype(jnp.float32) + enc_ref[...][None, :, :]
    tb, tlp, _ = x.shape
    x2 = x.reshape(tb * tlp, lanes)

    seg = seg_ref[...]                                    # (128, 128) f32 const
    inv_d = 1.0 / d
    # Segmented sums via MXU; each lane receives its own segment's sum.
    # precision=HIGHEST keeps the f32 data exact through the MXU.
    mean = jnp.dot(x2, seg, preferred_element_type=jnp.float32,
                   precision=lax.Precision.HIGHEST) * inv_d
    c = x2 - mean
    var = jnp.dot(c * c, seg, preferred_element_type=jnp.float32,
                  precision=lax.Precision.HIGHEST) * inv_d
    y = c * lax.rsqrt(var + eps)

    gb = gb_ref[...]                                      # (2, 128) f32
    y = y * gb[0:1, :] + gb[1:2, :]
    o_ref[...] = y.reshape(tb, tlp, lanes).astype(o_ref.dtype)


def _tempoenc_general_kernel(x_ref, enc_ref, gb_ref, o_ref, *, eps):
    """Fallback path for shapes that do not repack cleanly into 128 lanes."""
    x = x_ref[...].astype(jnp.float32) + enc_ref[...][None, :, :]
    mean = jnp.mean(x, axis=-1, keepdims=True)
    c = x - mean
    var = jnp.mean(c * c, axis=-1, keepdims=True)
    y = c * lax.rsqrt(var + eps)
    gb = gb_ref[...]                                      # (2, D) f32
    o_ref[...] = (y * gb[0:1, :][None, :, :] + gb[1:2, :][None, :, :]).astype(o_ref.dtype)


def tempo_enc_forward(x, emb_table, gamma, beta, start=0, t_left=None, *,
                      normal=True, eps=1e-6, min_pallas_elems=0):
    """Pallas implementation of TempoEnc.forward.

    x:         [B, L, D]
    emb_table: [n_time, D]  (nn.Embedding weight)
    gamma:     [D]          (LayerNorm weight)
    beta:      [D]          (LayerNorm bias)
    """
    B, L, D = x.shape

    # Embedding lookup is wrapper glue; keep it in f32 so the in-kernel add
    # never double-rounds when x is bf16.
    if t_left is None:
        enc = lax.dynamic_slice(emb_table, (start, 0), (L, D))
    else:
        enc = jnp.take(emb_table, jnp.asarray(t_left, dtype=jnp.int32), axis=0)
    enc = enc.astype(jnp.float32)

    if not normal:
        # No-LayerNorm branch: plain broadcast add (XLA fuses this fine).
        return (x.astype(jnp.float32) + enc[None, :, :]).astype(x.dtype)

    if B * L * D < min_pallas_elems:
        # Tiny inputs: pallas_call launch/pipeline overhead exceeds the whole
        # memory traffic; let XLA fuse the straight-line expression instead.
        y = x.astype(jnp.float32) + enc[None, :, :]
        mean = jnp.mean(y, axis=-1, keepdims=True)
        var = jnp.mean((y - mean) ** 2, axis=-1, keepdims=True)
        y = (y - mean) * lax.rsqrt(var + eps)
        return (y * gamma + beta).astype(x.dtype)

    gb = jnp.stack([gamma.astype(jnp.float32), beta.astype(jnp.float32)])  # (2, D)
    itemsize = int(jnp.dtype(x.dtype).itemsize)

    pack = (128 // D) if (D <= 128 and 128 % D == 0) else 1
    use_packed = pack > 1 and L % pack == 0

    compiler_params = pltpu.CompilerParams(
        dimension_semantics=("parallel", "parallel"),
        vmem_limit_bytes=_VMEM_LIMIT_BYTES)

    if use_packed:
        lanes = D * pack                     # == 128
        Lp = L // pack
        xp = x.reshape(B, Lp, lanes)         # free: [B, L, D] is contiguous
        encp = enc.reshape(Lp, lanes)
        gbp = jnp.tile(gb, (1, pack))        # (2, 128): lane j -> param[j % D]
        # Constant 128x128 block-diagonal ones matrix, built once outside the
        # kernel and passed with a constant index_map (64 KiB, VMEM-resident).
        grp = jnp.arange(lanes, dtype=jnp.int32) // D
        seg = (grp[:, None] == grp[None, :]).astype(jnp.float32)

        tB, tLp = _choose_tiles(B, Lp, lanes, itemsize)
        # Row axis OUTER, batch axis inner: the enc block index only changes
        # when the outer index changes, so enc is DMA'd once per row block.
        grid = (pl.cdiv(Lp, tLp), pl.cdiv(B, tB))
        cost = pl.CostEstimate(
            flops=4 * B * Lp * lanes * lanes + 8 * B * L * D,
            transcendentals=B * Lp * lanes,
            bytes_accessed=(2 * B * L * D * itemsize + L * D * 4
                            + lanes * lanes * 4 + 2 * lanes * 4),
        )
        out = pl.pallas_call(
            functools.partial(_tempoenc_packed_kernel, eps=eps, d=D),
            out_shape=jax.ShapeDtypeStruct((B, Lp, lanes), x.dtype),
            grid_spec=pltpu.PrefetchScalarGridSpec(
                num_scalar_prefetch=0,
                grid=grid,
                in_specs=[
                    pl.BlockSpec((tB, tLp, lanes), lambda li, bi: (bi, li, 0)),
                    pl.BlockSpec((tLp, lanes), lambda li, bi: (li, 0)),
                    pl.BlockSpec((2, lanes), lambda li, bi: (0, 0)),
                    pl.BlockSpec((lanes, lanes), lambda li, bi: (0, 0)),
                ],
                out_specs=pl.BlockSpec((tB, tLp, lanes),
                                       lambda li, bi: (bi, li, 0)),
            ),
            compiler_params=compiler_params,
            cost_estimate=cost,
        )(xp, encp, gbp, seg)
        return out.reshape(B, L, D)

    # General path (D does not pack cleanly into 128 lanes): last dim < 128
    # means masked stores / partial lane utilization; pad D at model level to a
    # divisor of 128 if these shapes matter for performance.
    tB, tL = _choose_tiles(B, L, D, itemsize)
    grid = (pl.cdiv(L, tL), pl.cdiv(B, tB))
    cost = pl.CostEstimate(
        flops=10 * B * L * D,
        transcendentals=B * L,
        bytes_accessed=2 * B * L * D * itemsize + L * D * 4 + 2 * D * 4,
    )
    return pl.pallas_call(
        functools.partial(_tempoenc_general_kernel, eps=eps),
        out_shape=jax.ShapeDtypeStruct((B, L, D), x.dtype),
        grid_spec=pltpu.PrefetchScalarGridSpec(
            num_scalar_prefetch=0,
            grid=grid,
            in_specs=[
                pl.BlockSpec((tB, tL, D), lambda li, bi: (bi, li, 0)),
                pl.BlockSpec((tL, D), lambda li, bi: (li, 0)),
                pl.BlockSpec((2, D), lambda li, bi: (0, 0)),
            ],
            out_specs=pl.BlockSpec((tB, tL, D), lambda li, bi: (bi, li, 0)),
        ),
        compiler_params=compiler_params,
        cost_estimate=cost,
    )(x, enc, gb)


def tempo_enc_reference(x, emb_table, gamma, beta, start=0, eps=1e-6):
    L = x.shape[-2]
    enc = emb_table[start:start + L]
    y = x.astype(jnp.float32) + enc[None, :, :].astype(jnp.float32)
    mean = jnp.mean(y, axis=-1, keepdims=True)
    var = jnp.mean((y - mean) ** 2, axis=-1, keepdims=True)
    y = (y - mean) * lax.rsqrt(var + eps)
    return (y * gamma + beta).astype(x.dtype)


if __name__ == "__main__":
    key = jax.random.PRNGKey(0)
    keys = jax.random.split(key, 10)

    # --- packed (lane-dense) path: n_time=16, n_attr=32, B=2, L=8 -----------
    n_time, n_attr = 16, 32
    B, L, start = 2, 8, 3
    x = jax.random.normal(keys[0], (B, L, n_attr), dtype=jnp.float32)
    emb_table = jax.random.normal(keys[1], (n_time, n_attr), dtype=jnp.float32)
    gamma = 1.0 + 0.1 * jax.random.normal(keys[2], (n_attr,), dtype=jnp.float32)
    beta = 0.05 * jax.random.normal(keys[3], (n_attr,), dtype=jnp.float32)

    out = tempo_enc_forward(x, emb_table, gamma, beta, start=start)
    out = jax.block_until_ready(out)
    ref = tempo_enc_reference(x, emb_table, gamma, beta, start=start)
    assert out.shape == (B, L, n_attr), out.shape
    assert jnp.allclose(out, ref, atol=5e-5, rtol=5e-5), \
        float(jnp.max(jnp.abs(out - ref)))

    # --- packed path, B=1 with non-divisible row tiling (edge blocks) -------
    n_time3, L3 = 512, 400
    x3 = jax.random.normal(keys[4], (1, L3, n_attr), dtype=jnp.float32)
    emb_table3 = jax.random.normal(keys[5], (n_time3, n_attr), dtype=jnp.float32)
    out3 = tempo_enc_forward(x3, emb_table3, gamma, beta, start=5)
    out3 = jax.block_until_ready(out3)
    ref3 = tempo_enc_reference(x3, emb_table3, gamma, beta, start=5)
    assert jnp.allclose(out3, ref3, atol=5e-5, rtol=5e-5), \
        float(jnp.max(jnp.abs(out3 - ref3)))

    # --- packed path, bf16 input (exercises itemsize-aware tiling) ----------
    x4 = jax.random.normal(keys[6], (2, 32, n_attr), dtype=jnp.float32)
    out4 = tempo_enc_forward(x4.astype(jnp.bfloat16), emb_table3, gamma, beta,
                             start=1)
    out4 = jax.block_until_ready(out4)
    ref4 = tempo_enc_reference(x4.astype(jnp.bfloat16), emb_table3, gamma,
                               beta, start=1)
    assert out4.dtype == jnp.bfloat16
    assert jnp.allclose(out4.astype(jnp.float32), ref4.astype(jnp.float32),
                        atol=3e-2, rtol=3e-2), \
        float(jnp.max(jnp.abs(out4.astype(jnp.float32)
                              - ref4.astype(jnp.float32))))

    # --- general fallback path (D does not divide 128): n_attr=48, L=7 ------
    n_time2, n_attr2, L2 = 12, 48, 7
    x2 = jax.random.normal(keys[7], (B, L2, n_attr2), dtype=jnp.float32)
    emb_table2 = jax.random.normal(keys[8], (n_time2, n_attr2), dtype=jnp.float32)
    gamma2 = jnp.ones((n_attr2,), dtype=jnp.float32)
    beta2 = jnp.zeros((n_attr2,), dtype=jnp.float32)
    out2 = tempo_enc_forward(x2, emb_table2, gamma2, beta2, start=2)
    out2 = jax.block_until_ready(out2)
    ref2 = tempo_enc_reference(x2, emb_table2, gamma2, beta2, start=2)
    assert jnp.allclose(out2, ref2, atol=5e-5, rtol=5e-5), \
        float(jnp.max(jnp.abs(out2 - ref2)))

    print("KERNEL_OK")
</pallas_src>

<mosaic_0001>
module attributes {stable_mosaic.version = 11 : i64} {
  func.func @_tempoenc_packed_kernel(%arg0: i32, %arg1: i32, %arg2: memref<1x2x128xf32, #tpu.memory_space<vmem>>, %arg3: memref<2x128xf32, #tpu.memory_space<vmem>>, %arg4: memref<2x128xf32, #tpu.memory_space<vmem>>, %arg5: memref<128x128xf32, #tpu.memory_space<vmem>>, %arg6: memref<1x2x128xf32, #tpu.memory_space<vmem>>) attributes {dimension_semantics = [#tpu.dimension_semantics<parallel>, #tpu.dimension_semantics<parallel>], iteration_bounds = array<i64: 1, 2>, scalar_prefetch = 0 : i64, scratch_operands = 0 : i64, tpu.core_type = #tpu.core_type<tc>, window_params = [{transform_indices = @transform_0, window_bounds = array<i64: 1, 2, 128>}, {transform_indices = @transform_1, window_bounds = array<i64: 2, 128>}, {pipeline_mode = #tpu.pipeline_mode<synchronous>, transform_indices = @transform_2, window_bounds = array<i64: 2, 128>}, {pipeline_mode = #tpu.pipeline_mode<synchronous>, transform_indices = @transform_3, window_bounds = array<i64: 128, 128>}, {transform_indices = @transform_4, window_bounds = array<i64: 1, 2, 128>}]} {
    %c0 = arith.constant 0 : index
    %c0_0 = arith.constant 0 : index
    %c0_1 = arith.constant 0 : index
    %0 = vector.load %arg2[%c0, %c0_0, %c0_1] : memref<1x2x128xf32, #tpu.memory_space<vmem>>, vector<1x2x128xf32>
    %c0_2 = arith.constant 0 : index
    %c0_3 = arith.constant 0 : index
    %1 = vector.load %arg3[%c0_2, %c0_3] : memref<2x128xf32, #tpu.memory_space<vmem>>, vector<2x128xf32>
    %2 = vector.shape_cast %1 : vector<2x128xf32> to vector<1x2x128xf32>
    %3 = arith.addf %0, %2 : vector<1x2x128xf32>
    %4 = vector.shape_cast %3 : vector<1x2x128xf32> to vector<2x128xf32>
    %c0_4 = arith.constant 0 : index
    %c0_5 = arith.constant 0 : index
    %5 = vector.load %arg5[%c0_4, %c0_5] : memref<128x128xf32, #tpu.memory_space<vmem>>, vector<128x128xf32>
    %cst = arith.constant dense<0.000000e+00> : vector<2x128xf32>
    %6 = tpu.matmul %4, %5, %cst {dimension_numbers = #tpu.dot_dimension_numbers<[1], [0], [0], [1], [0, 0, 1, 1], [], []>, precision = #tpu.contract_precision<fp32>} : vector<2x128xf32>, vector<128x128xf32>, vector<2x128xf32> -> vector<2x128xf32>
    %cst_6 = arith.constant 3.125000e-02 : f32
    %7 = vector.broadcast %cst_6 : f32 to vector<2x128xf32>
    %8 = arith.mulf %6, %7 : vector<2x128xf32>
    %9 = arith.subf %4, %8 : vector<2x128xf32>
    %10 = arith.mulf %9, %9 : vector<2x128xf32>
    %cst_7 = arith.constant dense<0.000000e+00> : vector<2x128xf32>
    %11 = tpu.matmul %10, %5, %cst_7 {dimension_numbers = #tpu.dot_dimension_numbers<[1], [0], [0], [1], [0, 0, 1, 1], [], []>, precision = #tpu.contract_precision<fp32>} : vector<2x128xf32>, vector<128x128xf32>, vector<2x128xf32> -> vector<2x128xf32>
    %cst_8 = arith.constant 3.125000e-02 : f32
    %12 = vector.broadcast %cst_8 : f32 to vector<2x128xf32>
    %13 = arith.mulf %11, %12 : vector<2x128xf32>
    %cst_9 = arith.constant 9.99999997E-7 : f32
    %14 = vector.broadcast %cst_9 : f32 to vector<2x128xf32>
    %15 = arith.addf %13, %14 : vector<2x128xf32>
    %16 = math.rsqrt %15 : vector<2x128xf32>
    %17 = arith.mulf %9, %16 : vector<2x128xf32>
    %c0_10 = arith.constant 0 : index
    %c0_11 = arith.constant 0 : index
    %18 = vector.load %arg4[%c0_10, %c0_11] : memref<2x128xf32, #tpu.memory_space<vmem>>, vector<2x128xf32>
    %19 = vector.extract_strided_slice %18 {offsets = [0, 0], sizes = [1, 128], strides = [1, 1]} : vector<2x128xf32> to vector<1x128xf32>
    %20 = vector.broadcast %19 : vector<1x128xf32> to vector<2x128xf32>
    %21 = arith.mulf %17, %20 : vector<2x128xf32>
    %22 = vector.extract_strided_slice %18 {offsets = [1, 0], sizes = [1, 128], strides = [1, 1]} : vector<2x128xf32> to vector<1x128xf32>
    %23 = vector.broadcast %22 : vector<1x128xf32> to vector<2x128xf32>
    %24 = arith.addf %21, %23 : vector<2x128xf32>
    %25 = vector.shape_cast %24 : vector<2x128xf32> to vector<1x2x128xf32>
    %c0_12 = arith.constant 0 : index
    %c0_13 = arith.constant 0 : index
    %c0_14 = arith.constant 0 : index
    %26 = vector.load %arg6[%c0_12, %c0_13, %c0_14] : memref<1x2x128xf32, #tpu.memory_space<vmem>>, vector<1x2x128xf32>
    tpu.vector_store %arg6[%c0_12, %c0_13, %c0_14], %25 {strides = array<i32>} : memref<1x2x128xf32, #tpu.memory_space<vmem>>, vector<1x2x128xf32>,
    return
  }
  func.func @transform_0(%arg0: i32, %arg1: i32) -> (i32, i32, i32) {
    %c0_i32 = arith.constant 0 : i32
    %c0_i32_0 = arith.constant 0 : i32
    return %arg1, %arg0, %c0_i32 : i32, i32, i32
  }
  func.func @transform_1(%arg0: i32, %arg1: i32) -> (i32, i32) {
    %c0_i32 = arith.constant 0 : i32
    %c0_i32_0 = arith.constant 0 : i32
    return %arg0, %c0_i32 : i32, i32
  }
  func.func @transform_2(%arg0: i32, %arg1: i32) -> (i32, i32) {
    %c0_i32 = arith.constant 0 : i32
    %c0_i32_0 = arith.constant 0 : i32
    %c0_i32_1 = arith.constant 0 : i32
    return %c0_i32, %c0_i32_0 : i32, i32
  }
  func.func @transform_3(%arg0: i32, %arg1: i32) -> (i32, i32) {
    %c0_i32 = arith.constant 0 : i32
    %c0_i32_0 = arith.constant 0 : i32
    %c0_i32_1 = arith.constant 0 : i32
    return %c0_i32, %c0_i32_0 : i32, i32
  }
  func.func @transform_4(%arg0: i32, %arg1: i32) -> (i32, i32, i32) {
    %c0_i32 = arith.constant 0 : i32
    %c0_i32_0 = arith.constant 0 : i32
    return %arg1, %arg0, %c0_i32 : i32, i32, i32
  }
}

</mosaic_0001>

<llo_original>
// kernel: tpu_custom_call.1
$region0: #{tpu_custom_call.1}
  #allocation0 [shape = 'u32[]', space=smem, size = 0x4, offset = 0x4, fixed_abs, tag = 'smem constant byte address 0x4 - core index']
  #allocation1 [shape = 'u32[72,128]{1,0:T(1,128)}', space=vmem, size = 0x9000, scoped, tag = 'internal scratch']
  %s0 = inlined_call_operand.hbm [shape: f32[2,2,128], index: 0, kind: input, shape index: {}]
  %s1 = inlined_call_operand.hbm [shape: f32[2,128], index: 1, kind: input, shape index: {}]
  %s2 = inlined_call_operand.hbm [shape: f32[2,128], index: 2, kind: input, shape index: {}]
  %s3 = inlined_call_operand.hbm [shape: f32[128,128], index: 3, kind: input, shape index: {}]
  %s4 = inlined_call_operand.hbm [shape: f32[2,2,128], index: 4, kind: output, shape index: {}]
  %s5 = sld [smem:[#allocation0]]
  $region65: #{tpu_custom_call.1} parent=0
    _
  %s7 = ssub.s32 1, %s5
  %s8 = scalar_select 0, %s7, %s5
  $region1: #{tpu_custom_call.1} parent=0
    #allocation2 [shape = 'u8[2048]{0}', space=vmem, size = 0x800, scoped, tag = 'input window, operand 0']
    #allocation3 [shape = 's32[2]{0}', space=sflag, size = 0x8, scoped, tag = 'scoped memory for tpu_custom_call.1']
    #allocation4 [shape = 's32[2]{0}', space=sflag, size = 0x8, scoped, tag = 'scoped memory for tpu_custom_call.1']
    #allocation5 [shape = 'u8[1024]{0}', space=vmem, size = 0x400, scoped, tag = 'input window, operand 1, single buffered']
    #allocation6 [shape = 's32[1]{0}', space=sflag, size = 0x4, scoped, tag = 'scoped memory for tpu_custom_call.1']
    #allocation7 [shape = 'u8[1024]{0}', space=vmem, size = 0x400, scoped, tag = 'input window, operand 2, single buffered']
    #allocation8 [shape = 'u8[65536]{0}', space=vmem, size = 0x10000, scoped, tag = 'input window, operand 3, single buffered']
    #allocation9 [shape = 's32[1]{0}', space=sflag, size = 0x4, scoped, tag = 'scoped memory for tpu_custom_call.1']
    #allocation10 [shape = 'u8[2048]{0}', space=vmem, size = 0x800, scoped, tag = 'output window, operand 0']
    %9 = vsyncpa [#allocation3], 0
    %s10 = scalar_lea.sflag [#allocation3], 1
    %11 = vsyncpa %s10, 0
    %12 = vsyncpa [#allocation6], 0
    %13 = vsyncpa [#allocation9], 0
    %14 = vsyncpa [#allocation4], 0
    %s15 = scalar_lea.sflag [#allocation4], 1
    %16 = vsyncpa %s15, 0
    loop: start=0, step=1, limit=4
    $region2: #{tpu_custom_call.1} parent=1 // loop_pre_header
      _
    $region3: #{tpu_custom_call.1} parent=1 // loop_header
      %s18 = sphi 0, %s22
      %p19 = scmp.ge.s32.totalorder %s18, 4
      %s25 = sphi 0, %s37
      %s26 = sphi 0, %s33
      %s27 = sphi 0, %s25
      %s28 = sphi 0, %s26
      %s29 = sphi 0, %s27
      %s30 = sphi 0, %s28
      %s42 = sphi 0, %s44
      %s45 = sphi 0, %s42
      %s46 = sphi 0, %s45
      %s62 = sphi 0, %s46
      %s68 = sphi 0, %s70
      %s71 = sphi 0, %s68
      %s72 = sphi 0, %s71
      %s88 = sphi 0, %s72
      %s92 = sphi 0, %s92
      %s94 = sphi 0, %s92
      %s95 = sphi 0, %s94
      %s109 = sphi 0, %s95
      %s113 = sphi 0, %s113
      %s115 = sphi 0, %s113
      %s116 = sphi 0, %s115
      %s130 = sphi 0, %s116
      %s138 = sphi 0, %s140
      %s141 = sphi 0, %s138
      %s142 = sphi 0, %s141
      %s158 = sphi 0, %s142
    $region4: #{tpu_custom_call.1} parent=1 // loop_header_branch
      %21 = sbr.rel (%p19) target = $region8
    $region5: #{tpu_custom_call.1} parent=1 // loop_body
      %s23 = ssub.s32 %s18, 1
      %s24 = ssub.s32 %s18, 2
      %s31 = sadd.s32 1, %s26
      %p32 = scmp.ge.s32.totalorder %s31, 2
      %s33 = scalar_select %p32, 0, %s31
      %s34 = sadd.s32 1, %s25
      %s35 = scalar_select %p32, %s34, %s25
      %p36 = scmp.ge.s32.totalorder %s35, 1
      %s37 = scalar_select %p36, 0, %s35
      %s38 = ssub.s32 %s26, %s33
      %s39 = ssub.s32 %s25, %s37
      %s40 = sor.u32 %s38, %s39
      %p41 = scmp.eq.s32.totalorder %s40, 0
      %s43 = sadd.s32 %s42, 1
      %s44 = scalar_select %p41, %s42, %s43
      %p47 = pneg %p41
      %p48 = scmp.eq.s32.totalorder %s18, 1
      %p49 = por %p47, %p48
      %p50 = scmp.ne.s32.totalorder %s42, %s45
      %p51 = scmp.eq.s32.totalorder %s18, 0
      %p52 = por %p50, %p51
      %p53 = scmp.ne.s32.totalorder %s42, %s45
      %p54 = scmp.eq.s32.totalorder %s23, 1
      %p55 = por %p53, %p54
      %p56 = scmp.ne.s32.totalorder %s45, %s46
      %p57 = scmp.eq.s32.totalorder %s23, 0
      %p58 = por %p56, %p57
      %p59 = scmp.ne.s32.totalorder %s45, %s46
      %p60 = scmp.eq.s32.totalorder %s24, 1
      %p61 = por %p59, %p60
      %p63 = scmp.ne.s32.totalorder %s46, %s62
      %p64 = scmp.eq.s32.totalorder %s24, 0
      %p65 = por %p63, %p64
      %s66 = ssub.s32 %s25, %s37
      %p67 = scmp.eq.s32.totalorder %s66, 0
      %s69 = sadd.s32 %s68, 1
      %s70 = scalar_select %p67, %s68, %s69
      %p73 = pneg %p67
      %p74 = scmp.eq.s32.totalorder %s18, 1
      %p75 = por %p73, %p74
      %p76 = scmp.ne.s32.totalorder %s68, %s71
      %p77 = scmp.eq.s32.totalorder %s18, 0
      %p78 = por %p76, %p77
      %p79 = scmp.ne.s32.totalorder %s68, %s71
      %p80 = scmp.eq.s32.totalorder %s23, 1
      %p81 = por %p79, %p80
      %p82 = scmp.ne.s32.totalorder %s71, %s72
      %p83 = scmp.eq.s32.totalorder %s23, 0
      %p84 = por %p82, %p83
      %p85 = scmp.ne.s32.totalorder %s71, %s72
      %p86 = scmp.eq.s32.totalorder %s24, 1
      %p87 = por %p85, %p86
      %p89 = scmp.ne.s32.totalorder %s72, %s88
      %p90 = scmp.eq.s32.totalorder %s24, 0
      %p91 = por %p89, %p90
      %s93 = sadd.s32 %s92, 1
      %p96 = scmp.eq.s32.totalorder %s18, 1
      %p97 = scmp.ne.s32.totalorder %s92, %s94
      %p98 = scmp.eq.s32.totalorder %s18, 0
      %p99 = por %p97, %p98
      %p100 = scmp.ne.s32.totalorder %s92, %s94
      %p101 = scmp.eq.s32.totalorder %s23, 1
      %p102 = por %p100, %p101
      %p103 = scmp.ne.s32.totalorder %s94, %s95
      %p104 = scmp.eq.s32.totalorder %s23, 0
      %p105 = por %p103, %p104
      %p106 = scmp.ne.s32.totalorder %s94, %s95
      %p107 = scmp.eq.s32.totalorder %s24, 1
      %p108 = por %p106, %p107
      %p110 = scmp.ne.s32.totalorder %s95, %s109
      %p111 = scmp.eq.s32.totalorder %s24, 0
      %p112 = por %p110, %p111
      %s114 = sadd.s32 %s113, 1
      %p117 = scmp.eq.s32.totalorder %s18, 1
      %p118 = scmp.ne.s32.totalorder %s113, %s115
      %p119 = scmp.eq.s32.totalorder %s18, 0
      %p120 = por %p118, %p119
      %p121 = scmp.ne.s32.totalorder %s113, %s115
      %p122 = scmp.eq.s32.totalorder %s23, 1
      %p123 = por %p121, %p122
      %p124 = scmp.ne.s32.totalorder %s115, %s116
      %p125 = scmp.eq.s32.totalorder %s23, 0
      %p126 = por %p124, %p125
      %p127 = scmp.ne.s32.totalorder %s115, %s116
      %p128 = scmp.eq.s32.totalorder %s24, 1
      %p129 = por %p127, %p128
      %p131 = scmp.ne.s32.totalorder %s116, %s130
      %p132 = scmp.eq.s32.totalorder %s24, 0
      %p133 = por %p131, %p132
      %s134 = ssub.s32 %s26, %s33
      %s135 = ssub.s32 %s25, %s37
      %s136 = sor.u32 %s134, %s135
      %p137 = scmp.eq.s32.totalorder %s136, 0
      %s139 = sadd.s32 %s138, 1
      %s140 = scalar_select %p137, %s138, %s139
      %p143 = pneg %p137
      %p144 = scmp.eq.s32.totalorder %s18, 1
      %p145 = por %p143, %p144
      %p146 = scmp.ne.s32.totalorder %s138, %s141
      %p147 = scmp.eq.s32.totalorder %s18, 0
      %p148 = por %p146, %p147
      %p149 = scmp.ne.s32.totalorder %s138, %s141
      %p150 = scmp.eq.s32.totalorder %s23, 1
      %p151 = por %p149, %p150
      %p152 = scmp.ne.s32.totalorder %s141, %s142
      %p153 = scmp.eq.s32.totalorder %s23, 0
      %p154 = por %p152, %p153
      %p155 = scmp.ne.s32.totalorder %s141, %s142
      %p156 = scmp.eq.s32.totalorder %s24, 1
      %p157 = por %p155, %p156
      %p159 = scmp.ne.s32.totalorder %s142, %s158
      %p160 = scmp.eq.s32.totalorder %s24, 0
      %p161 = por %p159, %p160
      %p162 = scmp.le.s32.totalorder 1, %s18
      %p163 = scmp.lt.s32.totalorder %s18, 3
      %p164 = pnand %p162, %p163
      %p165 = pneg %p164
      // Predicated region
      $region9: #{tpu_custom_call.1} parent=5 // pred_check
        _
      $region10: #{tpu_custom_call.1} parent=5 // pred_check_branch
        %167 = sbr.rel (%p164) target = $region12
      $region11: #{tpu_custom_call.1} parent=5 // pred_region
        %s168 = ssub.s32 %s18, 1
        // Predicated region
        $region13: #{tpu_custom_call.1} parent=11 // pred_check
          %p169 = pneg %p84
        $region14: #{tpu_custom_call.1} parent=11 // pred_check_branch
          %171 = sbr.rel (%p169) target = $region16
        $region15: #{tpu_custom_call.1} parent=11 // pred_region
          %173 = vsyncadd [#allocation6], 0
          %s174 = smul.addr %s27, 2
          %s175 = scalar_lea.hbm %s1, %s174
          %s177 = sshll.u32 %s175, 4
          %s178 = int_to_ptr.hbm [resolvable:$true] %s177
          %s179 = sshll.u32 [#allocation5], 4
          %s180 = int_to_ptr.vmem [resolvable:$true] %s179
          %182 = dma.hbm_to_vmem [thread:$0]  %s178, 32, %s180, [#allocation6]
        $region16: #{tpu_custom_call.1} parent=11 // pred_fallthru
          _
        // Predicated region
        $region17: #{tpu_custom_call.1} parent=11 // pred_check
          %p183 = pneg %p105
        $region18: #{tpu_custom_call.1} parent=11 // pred_check_branch
          %185 = sbr.rel (%p183) target = $region20
        $region19: #{tpu_custom_call.1} parent=11 // pred_region
          %187 = vsyncadd [#allocation6], 0
          %s189 = sshll.u32 %s2, 4
          %s190 = int_to_ptr.hbm [resolvable:$true] %s189
          %s191 = sshll.u32 [#allocation7], 4
          %s192 = int_to_ptr.vmem [resolvable:$true] %s191
          %194 = dma.hbm_to_vmem [thread:$0]  %s190, 32, %s192, [#allocation6]
        $region20: #{tpu_custom_call.1} parent=11 // pred_fallthru
          _
        // Predicated region
        $region21: #{tpu_custom_call.1} parent=11 // pred_check
          %p195 = pneg %p126
        $region22: #{tpu_custom_call.1} parent=11 // pred_check_branch
          %197 = sbr.rel (%p195) target = $region24
        $region23: #{tpu_custom_call.1} parent=11 // pred_region
          %199 = vsyncadd [#allocation9], 0
          %s200 = sshll.u32 %s3, 4
          %s201 = int_to_ptr.hbm [resolvable:$true] %s200
          %s202 = sshll.u32 [#allocation8], 4
          %s203 = int_to_ptr.vmem [resolvable:$true] %s202
          %208 = dma.hbm_to_vmem [thread:$0]  %s201, 2048, %s203, [#allocation9], 128, 128, 8
        $region24: #{tpu_custom_call.1} parent=11 // pred_fallthru
          _
      $region12: #{tpu_custom_call.1} parent=5 // pred_fallthru
        _
      %p209 = scmp.lt.s32.totalorder %s18, 2
      // Predicated region
      $region25: #{tpu_custom_call.1} parent=5 // pred_check
        %p210 = pneg %p209
      $region26: #{tpu_custom_call.1} parent=5 // pred_check_branch
        %212 = sbr.rel (%p210) target = $region28
      $region27: #{tpu_custom_call.1} parent=5 // pred_region
        // Predicated region
        $region29: #{tpu_custom_call.1} parent=27 // pred_check
          %p213 = pneg %p52
        $region30: #{tpu_custom_call.1} parent=27 // pred_check_branch
          %215 = sbr.rel (%p213) target = $region32
        $region31: #{tpu_custom_call.1} parent=27 // pred_region
          %s216 = sand.u32 %s42, 1
          %s217 = scalar_lea.sflag [#allocation3], %s216
          %s218 = sand.u32 %s42, 1
          %s219 = smul.addr %s218, 2
          %s220 = scalar_lea.vmem [#allocation2], %s219
          %222 = vsyncadd %s217, 0
          %s223 = sadd.s32 %s25, %s26
          %s224 = smul.addr %s223, 2
          %s225 = scalar_lea.hbm %s0, %s224
          %s227 = sshll.u32 %s225, 4
          %s228 = int_to_ptr.hbm [resolvable:$true] %s227
          %s229 = sshll.u32 %s220, 4
          %s230 = int_to_ptr.vmem [resolvable:$true] %s229
          %232 = dma.hbm_to_vmem [thread:$0]  %s228, 32, %s230, %s217
        $region32: #{tpu_custom_call.1} parent=27 // pred_fallthru
          _
      $region28: #{tpu_custom_call.1} parent=5 // pred_fallthru
        _
      %p233 = scmp.le.s32.totalorder 1, %s18
      %p234 = scmp.lt.s32.totalorder %s18, 3
      %p235 = pnand %p233, %p234
      %p236 = pneg %p235
      // Predicated region
      $region33: #{tpu_custom_call.1} parent=5 // pred_check
        _
      $region34: #{tpu_custom_call.1} parent=5 // pred_check_branch
        %238 = sbr.rel (%p235) target = $region36
      $region35: #{tpu_custom_call.1} parent=5 // pred_region
        %s239 = ssub.s32 %s18, 1
        %s240 = sand.u32 %s45, 1
        %s241 = scalar_lea.sflag [#allocation3], %s240
        %s242 = sand.u32 %s45, 1
        %s243 = smul.addr %s242, 2
        %s244 = scalar_lea.vmem [#allocation2], %s243
        // Predicated region
        $region37: #{tpu_custom_call.1} parent=35 // pred_check
          %p245 = pneg %p58
        $region38: #{tpu_custom_call.1} parent=35 // pred_check_branch
          %247 = sbr.rel (%p245) target = $region40
        $region39: #{tpu_custom_call.1} parent=35 // pred_region
          %249 = dma.done %s241, 32
        $region40: #{tpu_custom_call.1} parent=35 // pred_fallthru
          _
        // Predicated region
        $region41: #{tpu_custom_call.1} parent=35 // pred_check
          %p250 = pneg %p84
        $region42: #{tpu_custom_call.1} parent=35 // pred_check_branch
          %252 = sbr.rel (%p250) target = $region44
        $region43: #{tpu_custom_call.1} parent=35 // pred_region
          %254 = dma.done [#allocation6], 32
        $region44: #{tpu_custom_call.1} parent=35 // pred_fallthru
          _
        // Predicated region
        $region45: #{tpu_custom_call.1} parent=35 // pred_check
          %p255 = pneg %p105
        $region46: #{tpu_custom_call.1} parent=35 // pred_check_branch
          %257 = sbr.rel (%p255) target = $region48
        $region47: #{tpu_custom_call.1} parent=35 // pred_region
          %259 = dma.done [#allocation6], 32
        $region48: #{tpu_custom_call.1} parent=35 // pred_fallthru
          _
        // Predicated region
        $region49: #{tpu_custom_call.1} parent=35 // pred_check
          %p260 = pneg %p126
        $region50: #{tpu_custom_call.1} parent=35 // pred_check_branch
          %262 = sbr.rel (%p260) target = $region52
        $region51: #{tpu_custom_call.1} parent=35 // pred_region
          %264 = dma.done [#allocation9], 2048
        $region52: #{tpu_custom_call.1} parent=35 // pred_fallthru
          _
        %s265 = sand.u32 %s45, 1
        %s266 = scalar_lea.sflag [#allocation3], %s265
        %s267 = sand.u32 %s45, 1
        %s268 = smul.addr %s267, 2
        %s269 = scalar_lea.vmem [#allocation2], %s268
        %p270 = pneg %p58
        %p271 = pneg %p55
        %p272 = pneg %p84
        %p273 = pneg %p81
        %p274 = pneg %p105
        %p275 = pneg %p102
        %p276 = pneg %p126
        %p277 = pneg %p123
        %p278 = pneg %p154
        %p279 = pneg %p151
        %s280 = sand.u32 %s141, 1
        %s281 = scalar_lea.sflag [#allocation4], %s280
        %s282 = sand.u32 %s141, 1
        %s283 = smul.addr %s282, 2
        %s284 = scalar_lea.vmem [#allocation10], %s283
        %v285 = vld [vmem:[%s244] sm:$0x3]
        %v286 = vld [vmem:[#allocation5] sm:$0x3]
        %v287 = vadd.f32 %v285, %v286
        %v288 = vld [vmem:[#allocation8] sm:$0xff]
        %v289 = vld [vmem:[#allocation8 + $0x8] sm:$0xff]
        %v290 = vld [vmem:[#allocation8 + $0x10] sm:$0xff]
        %v291 = vld [vmem:[#allocation8 + $0x18] sm:$0xff]
        %v292 = vld [vmem:[#allocation8 + $0x20] sm:$0xff]
        %v293 = vld [vmem:[#allocation8 + $0x28] sm:$0xff]
        %v294 = vld [vmem:[#allocation8 + $0x30] sm:$0xff]
        %v295 = vld [vmem:[#allocation8 + $0x38] sm:$0xff]
        %v296 = vld [vmem:[#allocation8 + $0x40] sm:$0xff]
        %v297 = vld [vmem:[#allocation8 + $0x48] sm:$0xff]
        %v298 = vld [vmem:[#allocation8 + $0x50] sm:$0xff]
        %v299 = vld [vmem:[#allocation8 + $0x58] sm:$0xff]
        %v300 = vld [vmem:[#allocation8 + $0x60] sm:$0xff]
        %v301 = vld [vmem:[#allocation8 + $0x68] sm:$0xff]
        %v302 = vld [vmem:[#allocation8 + $0x70] sm:$0xff]
        %v303 = vld [vmem:[#allocation8 + $0x78] sm:$0xff]
        %v304 = vand.u32 %v303, 4294901760
        %305 = vmatpush.msra.mxu0 %v304
        %v306 = vand.u32 %v302, 4294901760
        %307 = vmatpush.msra.mxu0 %v306
        %v308 = vand.u32 %v301, 4294901760
        %309 = vmatpush.msra.mxu0 %v308
        %v310 = vand.u32 %v300, 4294901760
        %311 = vmatpush.msra.mxu0 %v310
        %v312 = vand.u32 %v299, 4294901760
        %313 = vmatpush.msra.mxu0 %v312
        %v314 = vand.u32 %v298, 4294901760
        %315 = vmatpush.msra.mxu0 %v314
        %v316 = vand.u32 %v297, 4294901760
        %317 = vmatpush.msra.mxu0 %v316
        %v318 = vand.u32 %v296, 4294901760
        %319 = vmatpush.msra.mxu0 %v318
        %v320 = vand.u32 %v295, 4294901760
        %321 = vmatpush.msra.mxu0 %v320
        %v322 = vand.u32 %v294, 4294901760
        %323 = vmatpush.msra.mxu0 %v322
        %v324 = vand.u32 %v293, 4294901760
        %325 = vmatpush.msra.mxu0 %v324
        %v326 = vand.u32 %v292, 4294901760
        %327 = vmatpush.msra.mxu0 %v326
        %v328 = vand.u32 %v291, 4294901760
        %329 = vmatpush.msra.mxu0 %v328
        %v330 = vand.u32 %v290, 4294901760
        %331 = vmatpush.msra.mxu0 %v330
        %v332 = vand.u32 %v289, 4294901760
        %333 = vmatpush.msra.mxu0 %v332
        %v334 = vand.u32 %v288, 4294901760
        %335 = vmatpush.msra.mxu0 %v334
        %v336 = vand.u32 %v287, 4294901760
        %v337 = vsub.f32 %v287, %v336
        %v338 = vand.u32 %v337, 4294901760
        %v339 = vsub.f32 %v337, %v338
        %v340 = vand.u32 %v339, 4294901760
        %341 = vmatmul.f32.gmra.mxu0 %v340
        %v342 = vpop.f32.mrf.mxu0
        %v343 = vadd.f32 0.0, %v342
        %344 = vdwg.mxu0
        %v345 = vand.u32 %v303, 4294901760
        %v346 = vsub.f32 %v303, %v345
        %v347 = vand.u32 %v346, 4294901760
        %v348 = vsub.f32 %v346, %v347
        %v349 = vand.u32 %v348, 4294901760
        %350 = vmatpush.msra.mxu0 %v349
        %v351 = vand.u32 %v302, 4294901760
        %v352 = vsub.f32 %v302, %v351
        %v353 = vand.u32 %v352, 4294901760
        %v354 = vsub.f32 %v352, %v353
        %v355 = vand.u32 %v354, 4294901760
        %356 = vmatpush.msra.mxu0 %v355
        %v357 = vand.u32 %v301, 4294901760
        %v358 = vsub.f32 %v301, %v357
        %v359 = vand.u32 %v358, 4294901760
        %v360 = vsub.f32 %v358, %v359
        %v361 = vand.u32 %v360, 4294901760
        %362 = vmatpush.msra.mxu0 %v361
        %v363 = vand.u32 %v300, 4294901760
        %v364 = vsub.f32 %v300, %v363
        %v365 = vand.u32 %v364, 4294901760
        %v366 = vsub.f32 %v364, %v365
        %v367 = vand.u32 %v366, 4294901760
        %368 = vmatpush.msra.mxu0 %v367
        %v369 = vand.u32 %v299, 4294901760
        %v370 = vsub.f32 %v299, %v369
        %v371 = vand.u32 %v370, 4294901760
        %v372 = vsub.f32 %v370, %v371
        %v373 = vand.u32 %v372, 4294901760
        %374 = vmatpush.msra.mxu0 %v373
        %v375 = vand.u32 %v298, 4294901760
        %v376 = vsub.f32 %v298, %v375
        %v377 = vand.u32 %v376, 4294901760
        %v378 = vsub.f32 %v376, %v377
        %v379 = vand.u32 %v378, 4294901760
        %380 = vmatpush.msra.mxu0 %v379
        %v381 = vand.u32 %v297, 4294901760
        %v382 = vsub.f32 %v297, %v381
        %v383 = vand.u32 %v382, 4294901760
        %v384 = vsub.f32 %v382, %v383
        %v385 = vand.u32 %v384, 4294901760
        %386 = vmatpush.msra.mxu0 %v385
        %v387 = vand.u32 %v296, 4294901760
        %v388 = vsub.f32 %v296, %v387
        %v389 = vand.u32 %v388, 4294901760
        %v390 = vsub.f32 %v388, %v389
        %v391 = vand.u32 %v390, 4294901760
        %392 = vmatpush.msra.mxu0 %v391
        %v393 = vand.u32 %v295, 4294901760
        %v394 = vsub.f32 %v295, %v393
        %v395 = vand.u32 %v394, 4294901760
        %v396 = vsub.f32 %v394, %v395
        %v397 = vand.u32 %v396, 4294901760
        %398 = vmatpush.msra.mxu0 %v397
        %v399 = vand.u32 %v294, 4294901760
        %v400 = vsub.f32 %v294, %v399
        %v401 = vand.u32 %v400, 4294901760
        %v402 = vsub.f32 %v400, %v401
        %v403 = vand.u32 %v402, 4294901760
        %404 = vmatpush.msra.mxu0 %v403
        %v405 = vand.u32 %v293, 4294901760
        %v406 = vsub.f32 %v293, %v405
        %v407 = vand.u32 %v406, 4294901760
        %v408 = vsub.f32 %v406, %v407
        %v409 = vand.u32 %v408, 4294901760
        %410 = vmatpush.msra.mxu0 %v409
        %v411 = vand.u32 %v292, 4294901760
        %v412 = vsub.f32 %v292, %v411
        %v413 = vand.u32 %v412, 4294901760
        %v414 = vsub.f32 %v412, %v413
        %v415 = vand.u32 %v414, 4294901760
        %416 = vmatpush.msra.mxu0 %v415
        %v417 = vand.u32 %v291, 4294901760
        %v418 = vsub.f32 %v291, %v417
        %v419 = vand.u32 %v418, 4294901760
        %v420 = vsub.f32 %v418, %v419
        %v421 = vand.u32 %v420, 4294901760
        %422 = vmatpush.msra.mxu0 %v421
        %v423 = vand.u32 %v290, 4294901760
        %v424 = vsub.f32 %v290, %v423
        %v425 = vand.u32 %v424, 4294901760
        %v426 = vsub.f32 %v424, %v425
        %v427 = vand.u32 %v426, 4294901760
        %428 = vmatpush.msra.mxu0 %v427
        %v429 = vand.u32 %v289, 4294901760
        %v430 = vsub.f32 %v289, %v429
        %v431 = vand.u32 %v430, 4294901760
        %v432 = vsub.f32 %v430, %v431
        %v433 = vand.u32 %v432, 4294901760
        %434 = vmatpush.msra.mxu0 %v433
        %v435 = vand.u32 %v288, 4294901760
        %v436 = vsub.f32 %v288, %v435
        %v437 = vand.u32 %v436, 4294901760
        %v438 = vsub.f32 %v436, %v437
        %v439 = vand.u32 %v438, 4294901760
        %440 = vmatpush.msra.mxu0 %v439
        %v441 = vand.u32 %v287, 4294901760
        %442 = vmatmul.f32.gmra.mxu0 %v441
        %v443 = vpop.f32.mrf.mxu0
        %v444 = vadd.f32 %v343, %v443
        %445 = vdwg.mxu0
        %v446 = vand.u32 %v303, 4294901760
        %v447 = vsub.f32 %v303, %v446
        %448 = vmatpush.msra.mxu0 %v447
        %v449 = vand.u32 %v302, 4294901760
        %v450 = vsub.f32 %v302, %v449
        %451 = vmatpush.msra.mxu0 %v450
        %v452 = vand.u32 %v301, 4294901760
        %v453 = vsub.f32 %v301, %v452
        %454 = vmatpush.msra.mxu0 %v453
        %v455 = vand.u32 %v300, 4294901760
        %v456 = vsub.f32 %v300, %v455
        %457 = vmatpush.msra.mxu0 %v456
        %v458 = vand.u32 %v299, 4294901760
        %v459 = vsub.f32 %v299, %v458
        %460 = vmatpush.msra.mxu0 %v459
        %v461 = vand.u32 %v298, 4294901760
        %v462 = vsub.f32 %v298, %v461
        %463 = vmatpush.msra.mxu0 %v462
        %v464 = vand.u32 %v297, 4294901760
        %v465 = vsub.f32 %v297, %v464
        %466 = vmatpush.msra.mxu0 %v465
        %v467 = vand.u32 %v296, 4294901760
        %v468 = vsub.f32 %v296, %v467
        %469 = vmatpush.msra.mxu0 %v468
        %v470 = vand.u32 %v295, 4294901760
        %v471 = vsub.f32 %v295, %v470
        %472 = vmatpush.msra.mxu0 %v471
        %v473 = vand.u32 %v294, 4294901760
        %v474 = vsub.f32 %v294, %v473
        %475 = vmatpush.msra.mxu0 %v474
        %v476 = vand.u32 %v293, 4294901760
        %v477 = vsub.f32 %v293, %v476
        %478 = vmatpush.msra.mxu0 %v477
        %v479 = vand.u32 %v292, 4294901760
        %v480 = vsub.f32 %v292, %v479
        %481 = vmatpush.msra.mxu0 %v480
        %v482 = vand.u32 %v291, 4294901760
        %v483 = vsub.f32 %v291, %v482
        %484 = vmatpush.msra.mxu0 %v483
        %v485 = vand.u32 %v290, 4294901760
        %v486 = vsub.f32 %v290, %v485
        %487 = vmatpush.msra.mxu0 %v486
        %v488 = vand.u32 %v289, 4294901760
        %v489 = vsub.f32 %v289, %v488
        %490 = vmatpush.msra.mxu0 %v489
        %v491 = vand.u32 %v288, 4294901760
        %v492 = vsub.f32 %v288, %v491
        %493 = vmatpush.msra.mxu0 %v492
        %v494 = vand.u32 %v287, 4294901760
        %v495 = vsub.f32 %v287, %v494
        %496 = vmatmul.f32.gmra.mxu0 %v495
        %v497 = vpop.f32.mrf.mxu0
        %v498 = vadd.f32 %v444, %v497
        %499 = vdwg.mxu0
        %v500 = vand.u32 %v303, 4294901760
        %501 = vmatpush.msra.mxu0 %v500
        %v502 = vand.u32 %v302, 4294901760
        %503 = vmatpush.msra.mxu0 %v502
        %v504 = vand.u32 %v301, 4294901760
        %505 = vmatpush.msra.mxu0 %v504
        %v506 = vand.u32 %v300, 4294901760
        %507 = vmatpush.msra.mxu0 %v506
        %v508 = vand.u32 %v299, 4294901760
        %509 = vmatpush.msra.mxu0 %v508
        %v510 = vand.u32 %v298, 4294901760
        %511 = vmatpush.msra.mxu0 %v510
        %v512 = vand.u32 %v297, 4294901760
        %513 = vmatpush.msra.mxu0 %v512
        %v514 = vand.u32 %v296, 4294901760
        %515 = vmatpush.msra.mxu0 %v514
        %v516 = vand.u32 %v295, 4294901760
        %517 = vmatpush.msra.mxu0 %v516
        %v518 = vand.u32 %v294, 4294901760
        %519 = vmatpush.msra.mxu0 %v518
        %v520 = vand.u32 %v293, 4294901760
        %521 = vmatpush.msra.mxu0 %v520
        %v522 = vand.u32 %v292, 4294901760
        %523 = vmatpush.msra.mxu0 %v522
        %v524 = vand.u32 %v291, 4294901760
        %525 = vmatpush.msra.mxu0 %v524
        %v526 = vand.u32 %v290, 4294901760
        %527 = vmatpush.msra.mxu0 %v526
        %v528 = vand.u32 %v289, 4294901760
        %529 = vmatpush.msra.mxu0 %v528
        %v530 = vand.u32 %v288, 4294901760
        %531 = vmatpush.msra.mxu0 %v530
        %v532 = vand.u32 %v287, 4294901760
        %v533 = vsub.f32 %v287, %v532
        %v534 = vand.u32 %v533, 4294901760
        %535 = vmatmul.f32.gmra.mxu0 %v534
        %v536 = vpop.f32.mrf.mxu0
        %v537 = vadd.f32 %v498, %v536
        %538 = vdwg.mxu0
        %v539 = vand.u32 %v303, 4294901760
        %v540 = vsub.f32 %v303, %v539
        %v541 = vand.u32 %v540, 4294901760
        %542 = vmatpush.msra.mxu0 %v541
        %v543 = vand.u32 %v302, 4294901760
        %v544 = vsub.f32 %v302, %v543
        %v545 = vand.u32 %v544, 4294901760
        %546 = vmatpush.msra.mxu0 %v545
        %v547 = vand.u32 %v301, 4294901760
        %v548 = vsub.f32 %v301, %v547
        %v549 = vand.u32 %v548, 4294901760
        %550 = vmatpush.msra.mxu0 %v549
        %v551 = vand.u32 %v300, 4294901760
        %v552 = vsub.f32 %v300, %v551
        %v553 = vand.u32 %v552, 4294901760
        %554 = vmatpush.msra.mxu0 %v553
        %v555 = vand.u32 %v299, 4294901760
        %v556 = vsub.f32 %v299, %v555
        %v557 = vand.u32 %v556, 4294901760
        %558 = vmatpush.msra.mxu0 %v557
        %v559 = vand.u32 %v298, 4294901760
        %v560 = vsub.f32 %v298, %v559
        %v561 = vand.u32 %v560, 4294901760
        %562 = vmatpush.msra.mxu0 %v561
        %v563 = vand.u32 %v297, 4294901760
        %v564 = vsub.f32 %v297, %v563
        %v565 = vand.u32 %v564, 4294901760
        %566 = vmatpush.msra.mxu0 %v565
        %v567 = vand.u32 %v296, 4294901760
        %v568 = vsub.f32 %v296, %v567
        %v569 = vand.u32 %v568, 4294901760
        %570 = vmatpush.msra.mxu0 %v569
        %v571 = vand.u32 %v295, 4294901760
        %v572 = vsub.f32 %v295, %v571
        %v573 = vand.u32 %v572, 4294901760
        %574 = vmatpush.msra.mxu0 %v573
        %v575 = vand.u32 %v294, 4294901760
        %v576 = vsub.f32 %v294, %v575
        %v577 = vand.u32 %v576, 4294901760
        %578 = vmatpush.msra.mxu0 %v577
        %v579 = vand.u32 %v293, 4294901760
        %v580 = vsub.f32 %v293, %v579
        %v581 = vand.u32 %v580, 4294901760
        %582 = vmatpush.msra.mxu0 %v581
        %v583 = vand.u32 %v292, 4294901760
        %v584 = vsub.f32 %v292, %v583
        %v585 = vand.u32 %v584, 4294901760
        %586 = vmatpush.msra.mxu0 %v585
        %v587 = vand.u32 %v291, 4294901760
        %v588 = vsub.f32 %v291, %v587
        %v589 = vand.u32 %v588, 4294901760
        %590 = vmatpush.msra.mxu0 %v589
        %v591 = vand.u32 %v290, 4294901760
        %v592 = vsub.f32 %v290, %v591
        %v593 = vand.u32 %v592, 4294901760
        %594 = vmatpush.msra.mxu0 %v593
        %v595 = vand.u32 %v289, 4294901760
        %v596 = vsub.f32 %v289, %v595
        %v597 = vand.u32 %v596, 4294901760
        %598 = vmatpush.msra.mxu0 %v597
        %v599 = vand.u32 %v288, 4294901760
        %v600 = vsub.f32 %v288, %v599
        %v601 = vand.u32 %v600, 4294901760
        %602 = vmatpush.msra.mxu0 %v601
        %v603 = vand.u32 %v287, 4294901760
        %604 = vmatmul.f32.gmra.mxu0 %v603
        %v605 = vpop.f32.mrf.mxu0
        %v606 = vadd.f32 %v537, %v605
        %607 = vdwg.mxu0
        %v608 = vand.u32 %v303, 4294901760
        %609 = vmatpush.msra.mxu0 %v608
        %v610 = vand.u32 %v302, 4294901760
        %611 = vmatpush.msra.mxu0 %v610
        %v612 = vand.u32 %v301, 4294901760
        %613 = vmatpush.msra.mxu0 %v612
        %v614 = vand.u32 %v300, 4294901760
        %615 = vmatpush.msra.mxu0 %v614
        %v616 = vand.u32 %v299, 4294901760
        %617 = vmatpush.msra.mxu0 %v616
        %v618 = vand.u32 %v298, 4294901760
        %619 = vmatpush.msra.mxu0 %v618
        %v620 = vand.u32 %v297, 4294901760
        %621 = vmatpush.msra.mxu0 %v620
        %v622 = vand.u32 %v296, 4294901760
        %623 = vmatpush.msra.mxu0 %v622
        %v624 = vand.u32 %v295, 4294901760
        %625 = vmatpush.msra.mxu0 %v624
        %v626 = vand.u32 %v294, 4294901760
        %627 = vmatpush.msra.mxu0 %v626
        %v628 = vand.u32 %v293, 4294901760
        %629 = vmatpush.msra.mxu0 %v628
        %v630 = vand.u32 %v292, 4294901760
        %631 = vmatpush.msra.mxu0 %v630
        %v632 = vand.u32 %v291, 4294901760
        %633 = vmatpush.msra.mxu0 %v632
        %v634 = vand.u32 %v290, 4294901760
        %635 = vmatpush.msra.mxu0 %v634
        %v636 = vand.u32 %v289, 4294901760
        %637 = vmatpush.msra.mxu0 %v636
        %v638 = vand.u32 %v288, 4294901760
        %639 = vmatpush.msra.mxu0 %v638
        %v640 = vand.u32 %v287, 4294901760
        %641 = vmatmul.f32.gmra.mxu0 %v640
        %v642 = vpop.f32.mrf.mxu0
        %v643 = vadd.f32 %v606, %v642
        %644 = vdwg.mxu0
        %v645 = vmul.f32 %v643, 0.03125
        %v646 = vsub.f32 %v287, %v645
        %v647 = vmul.f32 %v646, %v646
        %v648 = vand.u32 %v303, 4294901760
        %649 = vmatpush.msra.mxu0 %v648
        %v650 = vand.u32 %v302, 4294901760
        %651 = vmatpush.msra.mxu0 %v650
        %v652 = vand.u32 %v301, 4294901760
        %653 = vmatpush.msra.mxu0 %v652
        %v654 = vand.u32 %v300, 4294901760
        %655 = vmatpush.msra.mxu0 %v654
        %v656 = vand.u32 %v299, 4294901760
        %657 = vmatpush.msra.mxu0 %v656
        %v658 = vand.u32 %v298, 4294901760
        %659 = vmatpush.msra.mxu0 %v658
        %v660 = vand.u32 %v297, 4294901760
        %661 = vmatpush.msra.mxu0 %v660
        %v662 = vand.u32 %v296, 4294901760
        %663 = vmatpush.msra.mxu0 %v662
        %v664 = vand.u32 %v295, 4294901760
        %665 = vmatpush.msra.mxu0 %v664
        %v666 = vand.u32 %v294, 4294901760
        %667 = vmatpush.msra.mxu0 %v666
        %v668 = vand.u32 %v293, 4294901760
        %669 = vmatpush.msra.mxu0 %v668
        %v670 = vand.u32 %v292, 4294901760
        %671 = vmatpush.msra.mxu0 %v670
        %v672 = vand.u32 %v291, 4294901760
        %673 = vmatpush.msra.mxu0 %v672
        %v674 = vand.u32 %v290, 4294901760
        %675 = vmatpush.msra.mxu0 %v674
        %v676 = vand.u32 %v289, 4294901760
        %677 = vmatpush.msra.mxu0 %v676
        %v678 = vand.u32 %v288, 4294901760
        %679 = vmatpush.msra.mxu0 %v678
        %v680 = vand.u32 %v647, 4294901760
        %v681 = vsub.f32 %v647, %v680
        %v682 = vand.u32 %v681, 4294901760
        %v683 = vsub.f32 %v681, %v682
        %v684 = vand.u32 %v683, 4294901760
        %685 = vmatmul.f32.gmra.mxu0 %v684
        %v686 = vpop.f32.mrf.mxu0
        %v687 = vadd.f32 0.0, %v686
        %688 = vdwg.mxu0
        %v689 = vand.u32 %v303, 4294901760
        %v690 = vsub.f32 %v303, %v689
        %v691 = vand.u32 %v690, 4294901760
        %v692 = vsub.f32 %v690, %v691
        %v693 = vand.u32 %v692, 4294901760
        %694 = vmatpush.msra.mxu0 %v693
        %v695 = vand.u32 %v302, 4294901760
        %v696 = vsub.f32 %v302, %v695
        %v697 = vand.u32 %v696, 4294901760
        %v698 = vsub.f32 %v696, %v697
        %v699 = vand.u32 %v698, 4294901760
        %700 = vmatpush.msra.mxu0 %v699
        %v701 = vand.u32 %v301, 4294901760
        %v702 = vsub.f32 %v301, %v701
        %v703 = vand.u32 %v702, 4294901760
        %v704 = vsub.f32 %v702, %v703
        %v705 = vand.u32 %v704, 4294901760
        %706 = vmatpush.msra.mxu0 %v705
        %v707 = vand.u32 %v300, 4294901760
        %v708 = vsub.f32 %v300, %v707
        %v709 = vand.u32 %v708, 4294901760
        %v710 = vsub.f32 %v708, %v709
        %v711 = vand.u32 %v710, 4294901760
        %712 = vmatpush.msra.mxu0 %v711
        %v713 = vand.u32 %v299, 4294901760
        %v714 = vsub.f32 %v299, %v713
        %v715 = vand.u32 %v714, 4294901760
        %v716 = vsub.f32 %v714, %v715
        %v717 = vand.u32 %v716, 4294901760
        %718 = vmatpush.msra.mxu0 %v717
        %v719 = vand.u32 %v298, 4294901760
        %v720 = vsub.f32 %v298, %v719
        %v721 = vand.u32 %v720, 4294901760
        %v722 = vsub.f32 %v720, %v721
        %v723 = vand.u32 %v722, 4294901760
        %724 = vmatpush.msra.mxu0 %v723
        %v725 = vand.u32 %v297, 4294901760
        %v726 = vsub.f32 %v297, %v725
        %v727 = vand.u32 %v726, 4294901760
        %v728 = vsub.f32 %v726, %v727
        %v729 = vand.u32 %v728, 4294901760
        %730 = vmatpush.msra.mxu0 %v729
        %v731 = vand.u32 %v296, 4294901760
        %v732 = vsub.f32 %v296, %v731
        %v733 = vand.u32 %v732, 4294901760
        %v734 = vsub.f32 %v732, %v733
        %v735 = vand.u32 %v734, 4294901760
        %736 = vmatpush.msra.mxu0 %v735
        %v737 = vand.u32 %v295, 4294901760
        %v738 = vsub.f32 %v295, %v737
        %v739 = vand.u32 %v738, 4294901760
        %v740 = vsub.f32 %v738, %v739
        %v741 = vand.u32 %v740, 4294901760
        %742 = vmatpush.msra.mxu0 %v741
        %v743 = vand.u32 %v294, 4294901760
        %v744 = vsub.f32 %v294, %v743
        %v745 = vand.u32 %v744, 4294901760
        %v746 = vsub.f32 %v744, %v745
        %v747 = vand.u32 %v746, 4294901760
        %748 = vmatpush.msra.mxu0 %v747
        %v749 = vand.u32 %v293, 4294901760
        %v750 = vsub.f32 %v293, %v749
        %v751 = vand.u32 %v750, 4294901760
        %v752 = vsub.f32 %v750, %v751
        %v753 = vand.u32 %v752, 4294901760
        %754 = vmatpush.msra.mxu0 %v753
        %v755 = vand.u32 %v292, 4294901760
        %v756 = vsub.f32 %v292, %v755
        %v757 = vand.u32 %v756, 4294901760
        %v758 = vsub.f32 %v756, %v757
        %v759 = vand.u32 %v758, 4294901760
        %760 = vmatpush.msra.mxu0 %v759
        %v761 = vand.u32 %v291, 4294901760
        %v762 = vsub.f32 %v291, %v761
        %v763 = vand.u32 %v762, 4294901760
        %v764 = vsub.f32 %v762, %v763
        %v765 = vand.u32 %v764, 4294901760
        %766 = vmatpush.msra.mxu0 %v765
        %v767 = vand.u32 %v290, 4294901760
        %v768 = vsub.f32 %v290, %v767
        %v769 = vand.u32 %v768, 4294901760
        %v770 = vsub.f32 %v768, %v769
        %v771 = vand.u32 %v770, 4294901760
        %772 = vmatpush.msra.mxu0 %v771
        %v773 = vand.u32 %v289, 4294901760
        %v774 = vsub.f32 %v289, %v773
        %v775 = vand.u32 %v774, 4294901760
        %v776 = vsub.f32 %v774, %v775
        %v777 = vand.u32 %v776, 4294901760
        %778 = vmatpush.msra.mxu0 %v777
        %v779 = vand.u32 %v288, 4294901760
        %v780 = vsub.f32 %v288, %v779
        %v781 = vand.u32 %v780, 4294901760
        %v782 = vsub.f32 %v780, %v781
        %v783 = vand.u32 %v782, 4294901760
        %784 = vmatpush.msra.mxu0 %v783
        %v785 = vand.u32 %v647, 4294901760
        %786 = vmatmul.f32.gmra.mxu0 %v785
        %v787 = vpop.f32.mrf.mxu0
        %v788 = vadd.f32 %v687, %v787
        %789 = vdwg.mxu0
        %v790 = vand.u32 %v303, 4294901760
        %v791 = vsub.f32 %v303, %v790
        %792 = vmatpush.msra.mxu0 %v791
        %v793 = vand.u32 %v302, 4294901760
        %v794 = vsub.f32 %v302, %v793
        %795 = vmatpush.msra.mxu0 %v794
        %v796 = vand.u32 %v301, 4294901760
        %v797 = vsub.f32 %v301, %v796
        %798 = vmatpush.msra.mxu0 %v797
        %v799 = vand.u32 %v300, 4294901760
        %v800 = vsub.f32 %v300, %v799
        %801 = vmatpush.msra.mxu0 %v800
        %v802 = vand.u32 %v299, 4294901760
        %v803 = vsub.f32 %v299, %v802
        %804 = vmatpush.msra.mxu0 %v803
        %v805 = vand.u32 %v298, 4294901760
        %v806 = vsub.f32 %v298, %v805
        %807 = vmatpush.msra.mxu0 %v806
        %v808 = vand.u32 %v297, 4294901760
        %v809 = vsub.f32 %v297, %v808
        %810 = vmatpush.msra.mxu0 %v809
        %v811 = vand.u32 %v296, 4294901760
        %v812 = vsub.f32 %v296, %v811
        %813 = vmatpush.msra.mxu0 %v812
        %v814 = vand.u32 %v295, 4294901760
        %v815 = vsub.f32 %v295, %v814
        %816 = vmatpush.msra.mxu0 %v815
        %v817 = vand.u32 %v294, 4294901760
        %v818 = vsub.f32 %v294, %v817
        %819 = vmatpush.msra.mxu0 %v818
        %v820 = vand.u32 %v293, 4294901760
        %v821 = vsub.f32 %v293, %v820
        %822 = vmatpush.msra.mxu0 %v821
        %v823 = vand.u32 %v292, 4294901760
        %v824 = vsub.f32 %v292, %v823
        %825 = vmatpush.msra.mxu0 %v824
        %v826 = vand.u32 %v291, 4294901760
        %v827 = vsub.f32 %v291, %v826
        %828 = vmatpush.msra.mxu0 %v827
        %v829 = vand.u32 %v290, 4294901760
        %v830 = vsub.f32 %v290, %v829
        %831 = vmatpush.msra.mxu0 %v830
        %v832 = vand.u32 %v289, 4294901760
        %v833 = vsub.f32 %v289, %v832
        %834 = vmatpush.msra.mxu0 %v833
        %v835 = vand.u32 %v288, 4294901760
        %v836 = vsub.f32 %v288, %v835
        %837 = vmatpush.msra.mxu0 %v836
        %v838 = vand.u32 %v647, 4294901760
        %v839 = vsub.f32 %v647, %v838
        %840 = vmatmul.f32.gmra.mxu0 %v839
        %v841 = vpop.f32.mrf.mxu0
        %v842 = vadd.f32 %v788, %v841
        %843 = vdwg.mxu0
        %v844 = vand.u32 %v303, 4294901760
        %845 = vmatpush.msra.mxu0 %v844
        %v846 = vand.u32 %v302, 4294901760
        %847 = vmatpush.msra.mxu0 %v846
        %v848 = vand.u32 %v301, 4294901760
        %849 = vmatpush.msra.mxu0 %v848
        %v850 = vand.u32 %v300, 4294901760
        %851 = vmatpush.msra.mxu0 %v850
        %v852 = vand.u32 %v299, 4294901760
        %853 = vmatpush.msra.mxu0 %v852
        %v854 = vand.u32 %v298, 4294901760
        %855 = vmatpush.msra.mxu0 %v854
        %v856 = vand.u32 %v297, 4294901760
        %857 = vmatpush.msra.mxu0 %v856
        %v858 = vand.u32 %v296, 4294901760
        %859 = vmatpush.msra.mxu0 %v858
        %v860 = vand.u32 %v295, 4294901760
        %861 = vmatpush.msra.mxu0 %v860
        %v862 = vand.u32 %v294, 4294901760
        %863 = vmatpush.msra.mxu0 %v862
        %v864 = vand.u32 %v293, 4294901760
        %865 = vmatpush.msra.mxu0 %v864
        %v866 = vand.u32 %v292, 4294901760
        %867 = vmatpush.msra.mxu0 %v866
        %v868 = vand.u32 %v291, 4294901760
        %869 = vmatpush.msra.mxu0 %v868
        %v870 = vand.u32 %v290, 4294901760
        %871 = vmatpush.msra.mxu0 %v870
        %v872 = vand.u32 %v289, 4294901760
        %873 = vmatpush.msra.mxu0 %v872
        %v874 = vand.u32 %v288, 4294901760
        %875 = vmatpush.msra.mxu0 %v874
        %v876 = vand.u32 %v647, 4294901760
        %v877 = vsub.f32 %v647, %v876
        %v878 = vand.u32 %v877, 4294901760
        %879 = vmatmul.f32.gmra.mxu0 %v878
        %v880 = vpop.f32.mrf.mxu0
        %v881 = vadd.f32 %v842, %v880
        %882 = vdwg.mxu0
        %v883 = vand.u32 %v303, 4294901760
        %v884 = vsub.f32 %v303, %v883
        %v885 = vand.u32 %v884, 4294901760
        %886 = vmatpush.msra.mxu0 %v885
        %v887 = vand.u32 %v302, 4294901760
        %v888 = vsub.f32 %v302, %v887
        %v889 = vand.u32 %v888, 4294901760
        %890 = vmatpush.msra.mxu0 %v889
        %v891 = vand.u32 %v301, 4294901760
        %v892 = vsub.f32 %v301, %v891
        %v893 = vand.u32 %v892, 4294901760
        %894 = vmatpush.msra.mxu0 %v893
        %v895 = vand.u32 %v300, 4294901760
        %v896 = vsub.f32 %v300, %v895
        %v897 = vand.u32 %v896, 4294901760
        %898 = vmatpush.msra.mxu0 %v897
        %v899 = vand.u32 %v299, 4294901760
        %v900 = vsub.f32 %v299, %v899
        %v901 = vand.u32 %v900, 4294901760
        %902 = vmatpush.msra.mxu0 %v901
        %v903 = vand.u32 %v298, 4294901760
        %v904 = vsub.f32 %v298, %v903
        %v905 = vand.u32 %v904, 4294901760
        %906 = vmatpush.msra.mxu0 %v905
        %v907 = vand.u32 %v297, 4294901760
        %v908 = vsub.f32 %v297, %v907
        %v909 = vand.u32 %v908, 4294901760
        %910 = vmatpush.msra.mxu0 %v909
        %v911 = vand.u32 %v296, 4294901760
        %v912 = vsub.f32 %v296, %v911
        %v913 = vand.u32 %v912, 4294901760
        %914 = vmatpush.msra.mxu0 %v913
        %v915 = vand.u32 %v295, 4294901760
        %v916 = vsub.f32 %v295, %v915
        %v917 = vand.u32 %v916, 4294901760
        %918 = vmatpush.msra.mxu0 %v917
        %v919 = vand.u32 %v294, 4294901760
        %v920 = vsub.f32 %v294, %v919
        %v921 = vand.u32 %v920, 4294901760
        %922 = vmatpush.msra.mxu0 %v921
        %v923 = vand.u32 %v293, 4294901760
        %v924 = vsub.f32 %v293, %v923
        %v925 = vand.u32 %v924, 4294901760
        %926 = vmatpush.msra.mxu0 %v925
        %v927 = vand.u32 %v292, 4294901760
        %v928 = vsub.f32 %v292, %v927
        %v929 = vand.u32 %v928, 4294901760
        %930 = vmatpush.msra.mxu0 %v929
        %v931 = vand.u32 %v291, 4294901760
        %v932 = vsub.f32 %v291, %v931
        %v933 = vand.u32 %v932, 4294901760
        %934 = vmatpush.msra.mxu0 %v933
        %v935 = vand.u32 %v290, 4294901760
        %v936 = vsub.f32 %v290, %v935
        %v937 = vand.u32 %v936, 4294901760
        %938 = vmatpush.msra.mxu0 %v937
        %v939 = vand.u32 %v289, 4294901760
        %v940 = vsub.f32 %v289, %v939
        %v941 = vand.u32 %v940, 4294901760
        %942 = vmatpush.msra.mxu0 %v941
        %v943 = vand.u32 %v288, 4294901760
        %v944 = vsub.f32 %v288, %v943
        %v945 = vand.u32 %v944, 4294901760
        %946 = vmatpush.msra.mxu0 %v945
        %v947 = vand.u32 %v647, 4294901760
        %948 = vmatmul.f32.gmra.mxu0 %v947
        %v949 = vpop.f32.mrf.mxu0
        %v950 = vadd.f32 %v881, %v949
        %951 = vdwg.mxu0
        %v952 = vand.u32 %v303, 4294901760
        %953 = vmatpush.msra.mxu0 %v952
        %v954 = vand.u32 %v302, 4294901760
        %955 = vmatpush.msra.mxu0 %v954
        %v956 = vand.u32 %v301, 4294901760
        %957 = vmatpush.msra.mxu0 %v956
        %v958 = vand.u32 %v300, 4294901760
        %959 = vmatpush.msra.mxu0 %v958
        %v960 = vand.u32 %v299, 4294901760
        %961 = vmatpush.msra.mxu0 %v960
        %v962 = vand.u32 %v298, 4294901760
        %963 = vmatpush.msra.mxu0 %v962
        %v964 = vand.u32 %v297, 4294901760
        %965 = vmatpush.msra.mxu0 %v964
        %v966 = vand.u32 %v296, 4294901760
        %967 = vmatpush.msra.mxu0 %v966
        %v968 = vand.u32 %v295, 4294901760
        %969 = vmatpush.msra.mxu0 %v968
        %v970 = vand.u32 %v294, 4294901760
        %971 = vmatpush.msra.mxu0 %v970
        %v972 = vand.u32 %v293, 4294901760
        %973 = vmatpush.msra.mxu0 %v972
        %v974 = vand.u32 %v292, 4294901760
        %975 = vmatpush.msra.mxu0 %v974
        %v976 = vand.u32 %v291, 4294901760
        %977 = vmatpush.msra.mxu0 %v976
        %v978 = vand.u32 %v290, 4294901760
        %979 = vmatpush.msra.mxu0 %v978
        %v980 = vand.u32 %v289, 4294901760
        %981 = vmatpush.msra.mxu0 %v980
        %v982 = vand.u32 %v288, 4294901760
        %983 = vmatpush.msra.mxu0 %v982
        %v984 = vand.u32 %v647, 4294901760
        %985 = vmatmul.f32.gmra.mxu0 %v984
        %v986 = vpop.f32.mrf.mxu0
        %v987 = vadd.f32 %v950, %v986
        %988 = vdwg.mxu0
        %v989 = vmul.f32 %v987, 0.03125
        %v990 = vadd.f32 %v989, 1e-06
        %v991 = vrsqrt.pop %v990
        %v992 = vmul.f32 %v991, %v990
        %v993 = vmul.f32 %v992, %v991
        %v994 = vmul.f32 0.5, %v993
        %v995 = vsub.f32 1.5, %v994
        %v996 = vmul.f32 %v991, %v995
        %vm997 = vweird.f32 %v990
        %vm998 = vweird.f32 %v991
        %vm999 = vmor %vm997, %vm998
        %v1000 = vsel %vm999, %v991, %v996
        %v1001 = vmul.f32 %v646, %v1000
        %v1002 = vld [vmem:[#allocation7] sm:$0x3]
        %v1003 = vperm.slane %v1002, 0
        %v1004 = vmul.f32 %v1001, %v1003
        %v1005 = vperm.slane %v1002, 1
        %v1006 = vadd.f32 %v1004, %v1005
        %1007 = vst [vmem:[%s284] sm:$0x3] %v1006
        %s1008 = sand.u32 %s141, 1
        %s1009 = scalar_lea.sflag [#allocation4], %s1008
        %s1010 = sand.u32 %s141, 1
        %s1011 = smul.addr %s1010, 2
        %s1012 = scalar_lea.vmem [#allocation10], %s1011
        // Predicated region
        $region53: #{tpu_custom_call.1} parent=35 // pred_check
          %p1013 = pneg %p151
        $region54: #{tpu_custom_call.1} parent=35 // pred_check_branch
          %1015 = sbr.rel (%p1013) target = $region56
        $region55: #{tpu_custom_call.1} parent=35 // pred_region
          %1017 = vsyncadd %s1009, 0
          %s1018 = sadd.s32 %s27, %s28
          %s1019 = smul.addr %s1018, 2
          %s1020 = scalar_lea.hbm %s4, %s1019
          %s1022 = sshll.u32 %s1012, 4
          %s1023 = int_to_ptr.vmem [resolvable:$true] %s1022
          %s1024 = sshll.u32 %s1020, 4
          %s1025 = int_to_ptr.hbm [resolvable:$true] %s1024
          %1027 = dma.vmem_to_hbm [thread:$0]  %s1023, 32, %s1025, %s1009
        $region56: #{tpu_custom_call.1} parent=35 // pred_fallthru
          _
      $region36: #{tpu_custom_call.1} parent=5 // pred_fallthru
        _
      %p1028 = scmp.le.s32.totalorder 2, %s18
      // Predicated region
      $region57: #{tpu_custom_call.1} parent=5 // pred_check
        %p1029 = pneg %p1028
      $region58: #{tpu_custom_call.1} parent=5 // pred_check_branch
        %1031 = sbr.rel (%p1029) target = $region60
      $region59: #{tpu_custom_call.1} parent=5 // pred_region
        %s1032 = ssub.s32 %s18, 2
        // Predicated region
        $region61: #{tpu_custom_call.1} parent=59 // pred_check
          %p1033 = pneg %p157
        $region62: #{tpu_custom_call.1} parent=59 // pred_check_branch
          %1035 = sbr.rel (%p1033) target = $region64
        $region63: #{tpu_custom_call.1} parent=59 // pred_region
          %s1036 = sand.u32 %s142, 1
          %s1037 = scalar_lea.sflag [#allocation4], %s1036
          %s1038 = sand.u32 %s142, 1
          %s1039 = smul.addr %s1038, 2
          %s1040 = scalar_lea.vmem [#allocation10], %s1039
          %1042 = dma.done %s1037, 32
        $region64: #{tpu_custom_call.1} parent=59 // pred_fallthru
          _
      $region60: #{tpu_custom_call.1} parent=5 // pred_fallthru
        _
    $region6: #{tpu_custom_call.1} parent=1 // loop_footer
      %s22 = sadd.s32 1, %s18
    $region7: #{tpu_custom_call.1} parent=1 // loop_footer_branch
      %17 = sbr.rel target = $region3
    $region8: #{tpu_custom_call.1} parent=1 // loop_exit
      _
    %1043 = vsyncpa [#allocation3], 1
    %s1044 = scalar_lea.sflag [#allocation3], 1
    %1045 = vsyncpa %s1044, 1
    %1046 = vsyncpa [#allocation6], 1
    %1047 = vsyncpa [#allocation9], 1
    %1048 = vsyncpa [#allocation4], 1
    %s1049 = scalar_lea.sflag [#allocation4], 1
    %1050 = vsyncpa %s1049, 1

</llo_original>
